<compile_context>
chip_gen: v7x
topology: tpu7x:2x2x1
jax: 0.10.0
libtpu: 0.0.40
codegen_flags: <defaults>
</compile_context>

<pallas_src>
import jax
import jax.numpy as jnp
from jax.experimental import pallas as pl
from jax.experimental.pallas import tpu as pltpu


def _attn_kernel(g_ref, x_ref, wg_ref, bg_ref, wx_ref, bx_ref,
                 wp_ref, bp_ref, out_ref):
    # g_ref: (F_g, tm)   x_ref: (F_l, tm)   -- channels on sublanes, spatial on lanes
    g = g_ref[...].astype(jnp.float32)
    x = x_ref[...].astype(jnp.float32)

    g1 = jnp.dot(wg_ref[...], g, preferred_element_type=jnp.float32) + bg_ref[...]
    x1 = jnp.dot(wx_ref[...], x, preferred_element_type=jnp.float32) + bx_ref[...]
    h = jnp.maximum(g1 + x1, 0.0)                                   # ReLU, (F_int, tm)

    # psi projection as (1, F_int) @ (F_int, tm): lane-dense MXU output.
    p = jnp.dot(wp_ref[...], h, preferred_element_type=jnp.float32) + bp_ref[...]
    psi = jax.nn.sigmoid(p)                                         # (1, tm)

    out_ref[...] = (x * psi).astype(out_ref.dtype)                  # broadcast over F_l sublanes


def attention_block_pallas(g, x, params, *, tm=1024):
    """g: (N, F_g, H, W), x: (N, F_l, H, W)  (NCHW, like PyTorch)."""
    N, F_g, H, W = g.shape
    _, F_l, _, _ = x.shape
    F_int = params["wg_t"].shape[0]
    HW = H * W

    # Free reshapes (no transposes): channels-major layout is kept as-is.
    g_r = g.reshape(N, F_g, HW)
    x_r = x.reshape(N, F_l, HW)

    # Large spatial tile to amortize per-grid-step overhead; clamp to HW so a
    # single full-extent block is used when the image is small.  When HW > tm
    # and HW % tm != 0 the last block is partial; Pallas masks the writeback
    # and garbage lanes never mix across columns (all ops are per-column).
    tm_eff = min(tm, HW)
    grid = (N, pl.cdiv(HW, tm_eff))

    row_spec = lambda C: pl.BlockSpec((None, C, tm_eff), lambda n, i: (n, 0, i))
    full_spec = lambda shape: pl.BlockSpec(shape, lambda n, i: (0, 0))

    out_r = pl.pallas_call(
        _attn_kernel,
        out_shape=jax.ShapeDtypeStruct((N, F_l, HW), x.dtype),
        grid_spec=pltpu.PrefetchScalarGridSpec(
            num_scalar_prefetch=0,
            grid=grid,
            in_specs=[
                row_spec(F_g),                      # G tile      (F_g, tm)
                row_spec(F_l),                      # X tile      (F_l, tm)
                full_spec((F_int, F_g)),            # Wg^T (BN folded)
                full_spec((F_int, 1)),              # bg
                full_spec((F_int, F_l)),            # Wx^T (BN folded)
                full_spec((F_int, 1)),              # bx
                full_spec((1, F_int)),              # Wpsi^T (BN folded)
                full_spec((1, 1)),                  # bpsi
            ],
            out_specs=row_spec(F_l),
        ),
        compiler_params=pltpu.CompilerParams(
            dimension_semantics=("parallel", "parallel"),
            vmem_limit_bytes=48 * 1024 * 1024,
        ),
    )(g_r, x_r,
      params["wg_t"], params["bg"],
      params["wx_t"], params["bx"],
      params["wp_t"], params["bp"])

    return out_r.reshape(N, F_l, H, W)


def _fold_bn(w, b, gamma, beta, mean, var, eps=1e-5):
    """Fold eval-mode BatchNorm into a 1x1-conv (matmul) weight/bias.

    w: (C_in, C_out), b/gamma/beta/mean/var: (C_out,)
    Returns transposed weight (C_out, C_in) and bias (C_out, 1) for the
    channels-on-sublanes kernel layout.
    """
    scale = gamma / jnp.sqrt(var + eps)
    w_f = w * scale[None, :]
    b_f = (b - mean) * scale + beta
    return w_f.T, b_f[:, None]


def init_params(key, F_g, F_l, F_int, dtype=jnp.float32):
    ks = jax.random.split(key, 12)
    # conv weights stored as (C_in, C_out) matmul matrices before folding
    wg = jax.random.normal(ks[0], (F_g, F_int), dtype) * 0.1
    bg = jax.random.normal(ks[1], (F_int,), dtype) * 0.1
    wx = jax.random.normal(ks[2], (F_l, F_int), dtype) * 0.1
    bx = jax.random.normal(ks[3], (F_int,), dtype) * 0.1
    wp = jax.random.normal(ks[4], (F_int, 1), dtype) * 0.1
    bp = jax.random.normal(ks[5], (1,), dtype) * 0.1
    # BatchNorm params (deterministic, non-trivial values)
    bn_g = {"gamma": 1.0 + 0.1 * jax.random.normal(ks[6], (F_int,), dtype),
            "beta": 0.1 * jax.random.normal(ks[7], (F_int,), dtype),
            "mean": 0.05 * jax.random.normal(ks[8], (F_int,), dtype),
            "var": jnp.abs(1.0 + 0.1 * jax.random.normal(ks[9], (F_int,), dtype))}
    bn_x = {"gamma": 1.0 + 0.1 * jax.random.normal(ks[10], (F_int,), dtype),
            "beta": jnp.zeros((F_int,), dtype),
            "mean": jnp.zeros((F_int,), dtype),
            "var": jnp.ones((F_int,), dtype)}
    bn_p = {"gamma": jnp.ones((1,), dtype),
            "beta": 0.1 * jax.random.normal(ks[11], (1,), dtype),
            "mean": jnp.zeros((1,), dtype),
            "var": jnp.ones((1,), dtype)}

    wg_t, bg_f = _fold_bn(wg, bg, **bn_g)
    wx_t, bx_f = _fold_bn(wx, bx, **bn_x)
    wp_t, bp_f = _fold_bn(wp, bp, **bn_p)
    return {"wg_t": wg_t, "bg": bg_f,
            "wx_t": wx_t, "bx": bx_f,
            "wp_t": wp_t, "bp": bp_f}


def attention_block_ref(g, x, params):
    """Pure-JAX reference of the same (BN-folded, eval-mode) forward pass."""
    N, F_g, H, W = g.shape
    F_l = x.shape[1]
    gf = g.reshape(N, F_g, -1).astype(jnp.float32)    # (N, F_g, HW)
    xf = x.reshape(N, F_l, -1).astype(jnp.float32)
    g1 = jnp.einsum("if,nfm->nim", params["wg_t"], gf) + params["bg"]
    x1 = jnp.einsum("if,nfm->nim", params["wx_t"], xf) + params["bx"]
    h = jnp.maximum(g1 + x1, 0.0)
    psi = jax.nn.sigmoid(jnp.einsum("oi,nim->nom", params["wp_t"], h) + params["bp"])
    out = xf * psi
    return out.reshape(N, F_l, H, W).astype(x.dtype)


if __name__ == "__main__":
    key = jax.random.PRNGKey(0)
    k_g, k_x, k_p = jax.random.split(key, 3)

    N, F_g, F_l, F_int, H, W = 2, 4, 4, 8, 16, 16
    g = jax.random.normal(k_g, (N, F_g, H, W), jnp.float32)
    x = jax.random.normal(k_x, (N, F_l, H, W), jnp.float32)
    params = init_params(k_p, F_g, F_l, F_int)

    out = attention_block_pallas(g, x, params, tm=1024)
    out = jax.block_until_ready(out)

    ref = attention_block_ref(g, x, params)
    assert out.shape == (N, F_l, H, W)
    assert jnp.allclose(out, ref, atol=1e-5, rtol=1e-5)
    print("KERNEL_OK")
</pallas_src>

<mosaic_0001>
module attributes {stable_mosaic.version = 11 : i64} {
  func.func @_attn_kernel(%arg0: i32, %arg1: i32, %arg2: memref<1x4x256xf32, #tpu.memory_space<vmem>>, %arg3: memref<1x4x256xf32, #tpu.memory_space<vmem>>, %arg4: memref<8x4xf32, #tpu.memory_space<vmem>>, %arg5: memref<8x1xf32, #tpu.memory_space<vmem>>, %arg6: memref<8x4xf32, #tpu.memory_space<vmem>>, %arg7: memref<8x1xf32, #tpu.memory_space<vmem>>, %arg8: memref<1x8xf32, #tpu.memory_space<vmem>>, %arg9: memref<1x1xf32, #tpu.memory_space<vmem>>, %arg10: memref<1x4x256xf32, #tpu.memory_space<vmem>>) attributes {dimension_semantics = [#tpu.dimension_semantics<parallel>, #tpu.dimension_semantics<parallel>], iteration_bounds = array<i64: 2, 1>, scalar_prefetch = 0 : i64, scratch_operands = 0 : i64, tpu.core_type = #tpu.core_type<tc>, window_params = [{transform_indices = @transform_0, window_bounds = array<i64: 1, 4, 256>}, {transform_indices = @transform_1, window_bounds = array<i64: 1, 4, 256>}, {pipeline_mode = #tpu.pipeline_mode<synchronous>, transform_indices = @transform_2, window_bounds = array<i64: 8, 4>}, {pipeline_mode = #tpu.pipeline_mode<synchronous>, transform_indices = @transform_3, window_bounds = array<i64: 8, 1>}, {pipeline_mode = #tpu.pipeline_mode<synchronous>, transform_indices = @transform_4, window_bounds = array<i64: 8, 4>}, {pipeline_mode = #tpu.pipeline_mode<synchronous>, transform_indices = @transform_5, window_bounds = array<i64: 8, 1>}, {pipeline_mode = #tpu.pipeline_mode<synchronous>, transform_indices = @transform_6, window_bounds = array<i64: 1, 8>}, {pipeline_mode = #tpu.pipeline_mode<synchronous>, transform_indices = @transform_7, window_bounds = array<i64: 1, 1>}, {transform_indices = @transform_8, window_bounds = array<i64: 1, 4, 256>}]} {
    %c0 = arith.constant 0 : index
    %c0_0 = arith.constant 0 : index
    %c0_1 = arith.constant 0 : index
    %0 = vector.load %arg2[%c0, %c0_0, %c0_1] : memref<1x4x256xf32, #tpu.memory_space<vmem>>, vector<1x4x256xf32>
    %1 = vector.shape_cast %0 : vector<1x4x256xf32> to vector<4x256xf32>
    %c0_2 = arith.constant 0 : index
    %c0_3 = arith.constant 0 : index
    %c0_4 = arith.constant 0 : index
    %2 = vector.load %arg3[%c0_2, %c0_3, %c0_4] : memref<1x4x256xf32, #tpu.memory_space<vmem>>, vector<1x4x256xf32>
    %3 = vector.shape_cast %2 : vector<1x4x256xf32> to vector<4x256xf32>
    %c0_5 = arith.constant 0 : index
    %c0_6 = arith.constant 0 : index
    %4 = vector.load %arg4[%c0_5, %c0_6] : memref<8x4xf32, #tpu.memory_space<vmem>>, vector<8x4xf32>
    %cst = arith.constant dense<0.000000e+00> : vector<8x256xf32>
    %5 = tpu.matmul %4, %1, %cst {dimension_numbers = #tpu.dot_dimension_numbers<[1], [0], [0], [1], [0, 0, 1, 1], [], []>} : vector<8x4xf32>, vector<4x256xf32>, vector<8x256xf32> -> vector<8x256xf32>
    %c0_7 = arith.constant 0 : index
    %c0_8 = arith.constant 0 : index
    %6 = vector.load %arg5[%c0_7, %c0_8] : memref<8x1xf32, #tpu.memory_space<vmem>>, vector<8x1xf32>
    %7 = vector.broadcast %6 : vector<8x1xf32> to vector<8x256xf32>
    %8 = arith.addf %5, %7 : vector<8x256xf32>
    %c0_9 = arith.constant 0 : index
    %c0_10 = arith.constant 0 : index
    %9 = vector.load %arg6[%c0_9, %c0_10] : memref<8x4xf32, #tpu.memory_space<vmem>>, vector<8x4xf32>
    %cst_11 = arith.constant dense<0.000000e+00> : vector<8x256xf32>
    %10 = tpu.matmul %9, %3, %cst_11 {dimension_numbers = #tpu.dot_dimension_numbers<[1], [0], [0], [1], [0, 0, 1, 1], [], []>} : vector<8x4xf32>, vector<4x256xf32>, vector<8x256xf32> -> vector<8x256xf32>
    %c0_12 = arith.constant 0 : index
    %c0_13 = arith.constant 0 : index
    %11 = vector.load %arg7[%c0_12, %c0_13] : memref<8x1xf32, #tpu.memory_space<vmem>>, vector<8x1xf32>
    %12 = vector.broadcast %11 : vector<8x1xf32> to vector<8x256xf32>
    %13 = arith.addf %10, %12 : vector<8x256xf32>
    %14 = arith.addf %8, %13 : vector<8x256xf32>
    %cst_14 = arith.constant 0.000000e+00 : f32
    %15 = vector.broadcast %cst_14 : f32 to vector<8x256xf32>
    %16 = arith.maximumf %14, %15 : vector<8x256xf32>
    %c0_15 = arith.constant 0 : index
    %c0_16 = arith.constant 0 : index
    %17 = vector.load %arg8[%c0_15, %c0_16] : memref<1x8xf32, #tpu.memory_space<vmem>>, vector<1x8xf32>
    %cst_17 = arith.constant dense<0.000000e+00> : vector<1x256xf32>
    %18 = tpu.matmul %17, %16, %cst_17 {dimension_numbers = #tpu.dot_dimension_numbers<[1], [0], [0], [1], [0, 0, 1, 1], [], []>} : vector<1x8xf32>, vector<8x256xf32>, vector<1x256xf32> -> vector<1x256xf32>
    %c0_18 = arith.constant 0 : index
    %c0_19 = arith.constant 0 : index
    %19 = vector.load %arg9[%c0_18, %c0_19] : memref<1x1xf32, #tpu.memory_space<vmem>>, vector<1x1xf32>
    %20 = vector.broadcast %19 : vector<1x1xf32> to vector<1x256xf32>
    %21 = arith.addf %18, %20 : vector<1x256xf32>
    %22 = arith.negf %21 : vector<1x256xf32>
    %23 = math.exp %22 : vector<1x256xf32>
    %cst_20 = arith.constant 1.000000e+00 : f32
    %24 = vector.broadcast %cst_20 : f32 to vector<1x256xf32>
    %25 = arith.addf %24, %23 : vector<1x256xf32>
    %26 = arith.divf %24, %25 : vector<1x256xf32>
    %27 = vector.broadcast %26 : vector<1x256xf32> to vector<4x256xf32>
    %28 = arith.mulf %3, %27 : vector<4x256xf32>
    %c0_21 = arith.constant 0 : index
    %c0_22 = arith.constant 0 : index
    %c0_23 = arith.constant 0 : index
    %29 = vector.load %arg10[%c0_21, %c0_22, %c0_23] : memref<1x4x256xf32, #tpu.memory_space<vmem>>, vector<1x4x256xf32>
    %30 = vector.shape_cast %29 : vector<1x4x256xf32> to vector<4x256xf32>
    %31 = vector.shape_cast %28 : vector<4x256xf32> to vector<1x4x256xf32>
    tpu.vector_store %arg10[%c0_21, %c0_22, %c0_23], %31 {strides = array<i32>} : memref<1x4x256xf32, #tpu.memory_space<vmem>>, vector<1x4x256xf32>,
    return
  }
  func.func @transform_0(%arg0: i32, %arg1: i32) -> (i32, i32, i32) {
    %c0_i32 = arith.constant 0 : i32
    %c0_i32_0 = arith.constant 0 : i32
    return %arg0, %c0_i32, %arg1 : i32, i32, i32
  }
  func.func @transform_1(%arg0: i32, %arg1: i32) -> (i32, i32, i32) {
    %c0_i32 = arith.constant 0 : i32
    %c0_i32_0 = arith.constant 0 : i32
    return %arg0, %c0_i32, %arg1 : i32, i32, i32
  }
  func.func @transform_2(%arg0: i32, %arg1: i32) -> (i32, i32) {
    %c0_i32 = arith.constant 0 : i32
    %c0_i32_0 = arith.constant 0 : i32
    %c0_i32_1 = arith.constant 0 : i32
    return %c0_i32, %c0_i32_0 : i32, i32
  }
  func.func @transform_3(%arg0: i32, %arg1: i32) -> (i32, i32) {
    %c0_i32 = arith.constant 0 : i32
    %c0_i32_0 = arith.constant 0 : i32
    %c0_i32_1 = arith.constant 0 : i32
    return %c0_i32, %c0_i32_0 : i32, i32
  }
  func.func @transform_4(%arg0: i32, %arg1: i32) -> (i32, i32) {
    %c0_i32 = arith.constant 0 : i32
    %c0_i32_0 = arith.constant 0 : i32
    %c0_i32_1 = arith.constant 0 : i32
    return %c0_i32, %c0_i32_0 : i32, i32
  }
  func.func @transform_5(%arg0: i32, %arg1: i32) -> (i32, i32) {
    %c0_i32 = arith.constant 0 : i32
    %c0_i32_0 = arith.constant 0 : i32
    %c0_i32_1 = arith.constant 0 : i32
    return %c0_i32, %c0_i32_0 : i32, i32
  }
  func.func @transform_6(%arg0: i32, %arg1: i32) -> (i32, i32) {
    %c0_i32 = arith.constant 0 : i32
    %c0_i32_0 = arith.constant 0 : i32
    %c0_i32_1 = arith.constant 0 : i32
    return %c0_i32, %c0_i32_0 : i32, i32
  }
  func.func @transform_7(%arg0: i32, %arg1: i32) -> (i32, i32) {
    %c0_i32 = arith.constant 0 : i32
    %c0_i32_0 = arith.constant 0 : i32
    %c0_i32_1 = arith.constant 0 : i32
    return %c0_i32, %c0_i32_0 : i32, i32
  }
  func.func @transform_8(%arg0: i32, %arg1: i32) -> (i32, i32, i32) {
    %c0_i32 = arith.constant 0 : i32
    %c0_i32_0 = arith.constant 0 : i32
    return %arg0, %c0_i32, %arg1 : i32, i32, i32
  }
}

</mosaic_0001>

<llo_original>
// kernel: tpu_custom_call.1
$region0: #{tpu_custom_call.1}
  #allocation0 [shape = 'u32[]', space=smem, size = 0x4, offset = 0x4, fixed_abs, tag = 'smem constant byte address 0x4 - core index']
  #allocation1 [shape = 'u32[144,128]{1,0:T(1,128)}', space=vmem, size = 0x12000, scoped, tag = 'internal scratch']
  #allocation2 [shape = 'f32[1,1]{1,0:T(1,128)S(1)}', space=vmem, size = 0x200, scoped, tag = 'scoped memory for tpu_custom_call.1']
  %s0 = inlined_call_operand.vmem [shape: f32[2,4,256], index: 0, kind: input, shape index: {}]
  %s1 = inlined_call_operand.vmem [shape: f32[2,4,256], index: 1, kind: input, shape index: {}]
  %s2 = inlined_call_operand.vmem [shape: f32[8,4], index: 2, kind: input, shape index: {}]
  %s3 = inlined_call_operand.vmem [shape: f32[8,1], index: 3, kind: input, shape index: {}]
  %s4 = inlined_call_operand.vmem [shape: f32[8,4], index: 4, kind: input, shape index: {}]
  %s5 = inlined_call_operand.vmem [shape: f32[8,1], index: 5, kind: input, shape index: {}]
  %s6 = inlined_call_operand.vmem [shape: f32[1,8], index: 6, kind: input, shape index: {}]
  %s7 = inlined_call_operand.<no memory space> [shape: f32[1,1], index: 7, kind: input, shape index: {}]
  %s8 = inlined_call_operand.hbm [shape: f32[2,4,256], index: 8, kind: output, shape index: {}]
  %s9 = sld [smem:[#allocation0]]
  $region65: #{tpu_custom_call.1} parent=0
    _
  %s11 = ssub.s32 1, %s9
  %s12 = scalar_select 0, %s11, %s9
  %v13 = vstv %s7
  %14 = vst [vmem:[#allocation2] sm:$0x1] %v13
  $region1: #{tpu_custom_call.1} parent=0
    #allocation3 [shape = 'u8[8192]{0}', space=vmem, size = 0x2000, scoped, tag = 'output window, operand 0']
    #allocation4 [shape = 's32[2]{0}', space=sflag, size = 0x8, scoped, tag = 'scoped memory for tpu_custom_call.1']
    %15 = vsyncpa [#allocation4], 0
    %s16 = scalar_lea.sflag [#allocation4], 1
    %17 = vsyncpa %s16, 0
    loop: start=0, step=1, limit=4
    $region2: #{tpu_custom_call.1} parent=1 // loop_pre_header
      _
    $region3: #{tpu_custom_call.1} parent=1 // loop_header
      %s19 = sphi 0, %s23
      %p20 = scmp.ge.s32.totalorder %s19, 4
      %s26 = sphi 0, %s38
      %s27 = sphi 0, %s34
      %s28 = sphi 0, %s26
      %s29 = sphi 0, %s27
      %s30 = sphi 0, %s28
      %s31 = sphi 0, %s29
      %s43 = sphi 0, %s45
      %s46 = sphi 0, %s43
      %s47 = sphi 0, %s46
      %s63 = sphi 0, %s47
      %s71 = sphi 0, %s73
      %s74 = sphi 0, %s71
      %s75 = sphi 0, %s74
      %s91 = sphi 0, %s75
      %s95 = sphi 0, %s95
      %s97 = sphi 0, %s95
      %s98 = sphi 0, %s97
      %s112 = sphi 0, %s98
      %s116 = sphi 0, %s116
      %s118 = sphi 0, %s116
      %s119 = sphi 0, %s118
      %s133 = sphi 0, %s119
      %s137 = sphi 0, %s137
      %s139 = sphi 0, %s137
      %s140 = sphi 0, %s139
      %s154 = sphi 0, %s140
      %s158 = sphi 0, %s158
      %s160 = sphi 0, %s158
      %s161 = sphi 0, %s160
      %s175 = sphi 0, %s161
      %s179 = sphi 0, %s179
      %s181 = sphi 0, %s179
      %s182 = sphi 0, %s181
      %s196 = sphi 0, %s182
      %s200 = sphi 0, %s200
      %s202 = sphi 0, %s200
      %s203 = sphi 0, %s202
      %s217 = sphi 0, %s203
      %s225 = sphi 0, %s227
      %s228 = sphi 0, %s225
      %s229 = sphi 0, %s228
      %s245 = sphi 0, %s229
    $region4: #{tpu_custom_call.1} parent=1 // loop_header_branch
      %22 = sbr.rel (%p20) target = $region8
    $region5: #{tpu_custom_call.1} parent=1 // loop_body
      %s24 = ssub.s32 %s19, 1
      %s25 = ssub.s32 %s19, 2
      %s32 = sadd.s32 1, %s27
      %p33 = scmp.ge.s32.totalorder %s32, 1
      %s34 = scalar_select %p33, 0, %s32
      %s35 = sadd.s32 1, %s26
      %s36 = scalar_select %p33, %s35, %s26
      %p37 = scmp.ge.s32.totalorder %s36, 2
      %s38 = scalar_select %p37, 0, %s36
      %s39 = ssub.s32 %s26, %s38
      %s40 = ssub.s32 %s27, %s34
      %s41 = sor.u32 %s39, %s40
      %p42 = scmp.eq.s32.totalorder %s41, 0
      %s44 = sadd.s32 %s43, 1
      %s45 = scalar_select %p42, %s43, %s44
      %p48 = pneg %p42
      %p49 = scmp.eq.s32.totalorder %s19, 1
      %p50 = por %p48, %p49
      %p51 = scmp.ne.s32.totalorder %s43, %s46
      %p52 = scmp.eq.s32.totalorder %s19, 0
      %p53 = por %p51, %p52
      %p54 = scmp.ne.s32.totalorder %s43, %s46
      %p55 = scmp.eq.s32.totalorder %s24, 1
      %p56 = por %p54, %p55
      %p57 = scmp.ne.s32.totalorder %s46, %s47
      %p58 = scmp.eq.s32.totalorder %s24, 0
      %p59 = por %p57, %p58
      %p60 = scmp.ne.s32.totalorder %s46, %s47
      %p61 = scmp.eq.s32.totalorder %s25, 1
      %p62 = por %p60, %p61
      %p64 = scmp.ne.s32.totalorder %s47, %s63
      %p65 = scmp.eq.s32.totalorder %s25, 0
      %p66 = por %p64, %p65
      %s67 = ssub.s32 %s26, %s38
      %s68 = ssub.s32 %s27, %s34
      %s69 = sor.u32 %s67, %s68
      %p70 = scmp.eq.s32.totalorder %s69, 0
      %s72 = sadd.s32 %s71, 1
      %s73 = scalar_select %p70, %s71, %s72
      %p76 = pneg %p70
      %p77 = scmp.eq.s32.totalorder %s19, 1
      %p78 = por %p76, %p77
      %p79 = scmp.ne.s32.totalorder %s71, %s74
      %p80 = scmp.eq.s32.totalorder %s19, 0
      %p81 = por %p79, %p80
      %p82 = scmp.ne.s32.totalorder %s71, %s74
      %p83 = scmp.eq.s32.totalorder %s24, 1
      %p84 = por %p82, %p83
      %p85 = scmp.ne.s32.totalorder %s74, %s75
      %p86 = scmp.eq.s32.totalorder %s24, 0
      %p87 = por %p85, %p86
      %p88 = scmp.ne.s32.totalorder %s74, %s75
      %p89 = scmp.eq.s32.totalorder %s25, 1
      %p90 = por %p88, %p89
      %p92 = scmp.ne.s32.totalorder %s75, %s91
      %p93 = scmp.eq.s32.totalorder %s25, 0
      %p94 = por %p92, %p93
      %s96 = sadd.s32 %s95, 1
      %p99 = scmp.eq.s32.totalorder %s19, 1
      %p100 = scmp.ne.s32.totalorder %s95, %s97
      %p101 = scmp.eq.s32.totalorder %s19, 0
      %p102 = por %p100, %p101
      %p103 = scmp.ne.s32.totalorder %s95, %s97
      %p104 = scmp.eq.s32.totalorder %s24, 1
      %p105 = por %p103, %p104
      %p106 = scmp.ne.s32.totalorder %s97, %s98
      %p107 = scmp.eq.s32.totalorder %s24, 0
      %p108 = por %p106, %p107
      %p109 = scmp.ne.s32.totalorder %s97, %s98
      %p110 = scmp.eq.s32.totalorder %s25, 1
      %p111 = por %p109, %p110
      %p113 = scmp.ne.s32.totalorder %s98, %s112
      %p114 = scmp.eq.s32.totalorder %s25, 0
      %p115 = por %p113, %p114
      %s117 = sadd.s32 %s116, 1
      %p120 = scmp.eq.s32.totalorder %s19, 1
      %p121 = scmp.ne.s32.totalorder %s116, %s118
      %p122 = scmp.eq.s32.totalorder %s19, 0
      %p123 = por %p121, %p122
      %p124 = scmp.ne.s32.totalorder %s116, %s118
      %p125 = scmp.eq.s32.totalorder %s24, 1
      %p126 = por %p124, %p125
      %p127 = scmp.ne.s32.totalorder %s118, %s119
      %p128 = scmp.eq.s32.totalorder %s24, 0
      %p129 = por %p127, %p128
      %p130 = scmp.ne.s32.totalorder %s118, %s119
      %p131 = scmp.eq.s32.totalorder %s25, 1
      %p132 = por %p130, %p131
      %p134 = scmp.ne.s32.totalorder %s119, %s133
      %p135 = scmp.eq.s32.totalorder %s25, 0
      %p136 = por %p134, %p135
      %s138 = sadd.s32 %s137, 1
      %p141 = scmp.eq.s32.totalorder %s19, 1
      %p142 = scmp.ne.s32.totalorder %s137, %s139
      %p143 = scmp.eq.s32.totalorder %s19, 0
      %p144 = por %p142, %p143
      %p145 = scmp.ne.s32.totalorder %s137, %s139
      %p146 = scmp.eq.s32.totalorder %s24, 1
      %p147 = por %p145, %p146
      %p148 = scmp.ne.s32.totalorder %s139, %s140
      %p149 = scmp.eq.s32.totalorder %s24, 0
      %p150 = por %p148, %p149
      %p151 = scmp.ne.s32.totalorder %s139, %s140
      %p152 = scmp.eq.s32.totalorder %s25, 1
      %p153 = por %p151, %p152
      %p155 = scmp.ne.s32.totalorder %s140, %s154
      %p156 = scmp.eq.s32.totalorder %s25, 0
      %p157 = por %p155, %p156
      %s159 = sadd.s32 %s158, 1
      %p162 = scmp.eq.s32.totalorder %s19, 1
      %p163 = scmp.ne.s32.totalorder %s158, %s160
      %p164 = scmp.eq.s32.totalorder %s19, 0
      %p165 = por %p163, %p164
      %p166 = scmp.ne.s32.totalorder %s158, %s160
      %p167 = scmp.eq.s32.totalorder %s24, 1
      %p168 = por %p166, %p167
      %p169 = scmp.ne.s32.totalorder %s160, %s161
      %p170 = scmp.eq.s32.totalorder %s24, 0
      %p171 = por %p169, %p170
      %p172 = scmp.ne.s32.totalorder %s160, %s161
      %p173 = scmp.eq.s32.totalorder %s25, 1
      %p174 = por %p172, %p173
      %p176 = scmp.ne.s32.totalorder %s161, %s175
      %p177 = scmp.eq.s32.totalorder %s25, 0
      %p178 = por %p176, %p177
      %s180 = sadd.s32 %s179, 1
      %p183 = scmp.eq.s32.totalorder %s19, 1
      %p184 = scmp.ne.s32.totalorder %s179, %s181
      %p185 = scmp.eq.s32.totalorder %s19, 0
      %p186 = por %p184, %p185
      %p187 = scmp.ne.s32.totalorder %s179, %s181
      %p188 = scmp.eq.s32.totalorder %s24, 1
      %p189 = por %p187, %p188
      %p190 = scmp.ne.s32.totalorder %s181, %s182
      %p191 = scmp.eq.s32.totalorder %s24, 0
      %p192 = por %p190, %p191
      %p193 = scmp.ne.s32.totalorder %s181, %s182
      %p194 = scmp.eq.s32.totalorder %s25, 1
      %p195 = por %p193, %p194
      %p197 = scmp.ne.s32.totalorder %s182, %s196
      %p198 = scmp.eq.s32.totalorder %s25, 0
      %p199 = por %p197, %p198
      %s201 = sadd.s32 %s200, 1
      %p204 = scmp.eq.s32.totalorder %s19, 1
      %p205 = scmp.ne.s32.totalorder %s200, %s202
      %p206 = scmp.eq.s32.totalorder %s19, 0
      %p207 = por %p205, %p206
      %p208 = scmp.ne.s32.totalorder %s200, %s202
      %p209 = scmp.eq.s32.totalorder %s24, 1
      %p210 = por %p208, %p209
      %p211 = scmp.ne.s32.totalorder %s202, %s203
      %p212 = scmp.eq.s32.totalorder %s24, 0
      %p213 = por %p211, %p212
      %p214 = scmp.ne.s32.totalorder %s202, %s203
      %p215 = scmp.eq.s32.totalorder %s25, 1
      %p216 = por %p214, %p215
      %p218 = scmp.ne.s32.totalorder %s203, %s217
      %p219 = scmp.eq.s32.totalorder %s25, 0
      %p220 = por %p218, %p219
      %s221 = ssub.s32 %s26, %s38
      %s222 = ssub.s32 %s27, %s34
      %s223 = sor.u32 %s221, %s222
      %p224 = scmp.eq.s32.totalorder %s223, 0
      %s226 = sadd.s32 %s225, 1
      %s227 = scalar_select %p224, %s225, %s226
      %p230 = pneg %p224
      %p231 = scmp.eq.s32.totalorder %s19, 1
      %p232 = por %p230, %p231
      %p233 = scmp.ne.s32.totalorder %s225, %s228
      %p234 = scmp.eq.s32.totalorder %s19, 0
      %p235 = por %p233, %p234
      %p236 = scmp.ne.s32.totalorder %s225, %s228
      %p237 = scmp.eq.s32.totalorder %s24, 1
      %p238 = por %p236, %p237
      %p239 = scmp.ne.s32.totalorder %s228, %s229
      %p240 = scmp.eq.s32.totalorder %s24, 0
      %p241 = por %p239, %p240
      %p242 = scmp.ne.s32.totalorder %s228, %s229
      %p243 = scmp.eq.s32.totalorder %s25, 1
      %p244 = por %p242, %p243
      %p246 = scmp.ne.s32.totalorder %s229, %s245
      %p247 = scmp.eq.s32.totalorder %s25, 0
      %p248 = por %p246, %p247
      %p249 = scmp.le.s32.totalorder 1, %s19
      %p250 = scmp.lt.s32.totalorder %s19, 3
      %p251 = pnand %p249, %p250
      %p252 = pneg %p251
      // Predicated region
      $region9: #{tpu_custom_call.1} parent=5 // pred_check
        _
      $region10: #{tpu_custom_call.1} parent=5 // pred_check_branch
        %254 = sbr.rel (%p251) target = $region12
      $region11: #{tpu_custom_call.1} parent=5 // pred_region
        %s255 = ssub.s32 %s19, 1
        // Predicated region
        $region13: #{tpu_custom_call.1} parent=11 // pred_check
          %p256 = pneg %p108
        $region14: #{tpu_custom_call.1} parent=11 // pred_check_branch
          %258 = sbr.rel (%p256) target = $region16
        $region15: #{tpu_custom_call.1} parent=11 // pred_region
          _
        $region16: #{tpu_custom_call.1} parent=11 // pred_fallthru
          _
        // Predicated region
        $region17: #{tpu_custom_call.1} parent=11 // pred_check
          %p259 = pneg %p129
        $region18: #{tpu_custom_call.1} parent=11 // pred_check_branch
          %261 = sbr.rel (%p259) target = $region20
        $region19: #{tpu_custom_call.1} parent=11 // pred_region
          _
        $region20: #{tpu_custom_call.1} parent=11 // pred_fallthru
          _
        // Predicated region
        $region21: #{tpu_custom_call.1} parent=11 // pred_check
          %p262 = pneg %p150
        $region22: #{tpu_custom_call.1} parent=11 // pred_check_branch
          %264 = sbr.rel (%p262) target = $region24
        $region23: #{tpu_custom_call.1} parent=11 // pred_region
          _
        $region24: #{tpu_custom_call.1} parent=11 // pred_fallthru
          _
        // Predicated region
        $region25: #{tpu_custom_call.1} parent=11 // pred_check
          %p265 = pneg %p171
        $region26: #{tpu_custom_call.1} parent=11 // pred_check_branch
          %267 = sbr.rel (%p265) target = $region28
        $region27: #{tpu_custom_call.1} parent=11 // pred_region
          _
        $region28: #{tpu_custom_call.1} parent=11 // pred_fallthru
          _
        // Predicated region
        $region29: #{tpu_custom_call.1} parent=11 // pred_check
          %p268 = pneg %p192
        $region30: #{tpu_custom_call.1} parent=11 // pred_check_branch
          %270 = sbr.rel (%p268) target = $region32
        $region31: #{tpu_custom_call.1} parent=11 // pred_region
          _
        $region32: #{tpu_custom_call.1} parent=11 // pred_fallthru
          _
        // Predicated region
        $region33: #{tpu_custom_call.1} parent=11 // pred_check
          %p271 = pneg %p213
        $region34: #{tpu_custom_call.1} parent=11 // pred_check_branch
          %273 = sbr.rel (%p271) target = $region36
        $region35: #{tpu_custom_call.1} parent=11 // pred_region
          _
        $region36: #{tpu_custom_call.1} parent=11 // pred_fallthru
          _
      $region12: #{tpu_custom_call.1} parent=5 // pred_fallthru
        _
      %p274 = scmp.lt.s32.totalorder %s19, 2
      // Predicated region
      $region37: #{tpu_custom_call.1} parent=5 // pred_check
        %p275 = pneg %p274
      $region38: #{tpu_custom_call.1} parent=5 // pred_check_branch
        %277 = sbr.rel (%p275) target = $region40
      $region39: #{tpu_custom_call.1} parent=5 // pred_region
        // Predicated region
        $region41: #{tpu_custom_call.1} parent=39 // pred_check
          %p278 = pneg %p53
        $region42: #{tpu_custom_call.1} parent=39 // pred_check_branch
          %280 = sbr.rel (%p278) target = $region44
        $region43: #{tpu_custom_call.1} parent=39 // pred_region
          %s281 = smul.u32 2, %s27
          %p282 = scmp.lt.s32.totalorder %s26, 1
          %s283 = scalar_select %p282, %s26, 1
          %p284 = scmp.lt.s32.totalorder %s281, 1
          %s285 = scalar_select %p284, %s281, 1
          %s286 = smul.addr %s283, 2
          %s287 = sadd.s32 %s285, %s286
          %s288 = smul.addr %s287, 4
          %s289 = scalar_lea.vmem %s0, %s288
          %s290 = smul.u32 2, %s27
        $region44: #{tpu_custom_call.1} parent=39 // pred_fallthru
          _
        // Predicated region
        $region45: #{tpu_custom_call.1} parent=39 // pred_check
          %p291 = pneg %p81
        $region46: #{tpu_custom_call.1} parent=39 // pred_check_branch
          %293 = sbr.rel (%p291) target = $region48
        $region47: #{tpu_custom_call.1} parent=39 // pred_region
          %s294 = smul.u32 2, %s27
          %p295 = scmp.lt.s32.totalorder %s26, 1
          %s296 = scalar_select %p295, %s26, 1
          %p297 = scmp.lt.s32.totalorder %s294, 1
          %s298 = scalar_select %p297, %s294, 1
          %s299 = smul.addr %s296, 2
          %s300 = sadd.s32 %s298, %s299
          %s301 = smul.addr %s300, 4
          %s302 = scalar_lea.vmem %s1, %s301
          %s303 = smul.u32 2, %s27
        $region48: #{tpu_custom_call.1} parent=39 // pred_fallthru
          _
      $region40: #{tpu_custom_call.1} parent=5 // pred_fallthru
        _
      %p304 = scmp.le.s32.totalorder 1, %s19
      %p305 = scmp.lt.s32.totalorder %s19, 3
      %p306 = pnand %p304, %p305
      %p307 = pneg %p306
      // Predicated region
      $region49: #{tpu_custom_call.1} parent=5 // pred_check
        _
      $region50: #{tpu_custom_call.1} parent=5 // pred_check_branch
        %309 = sbr.rel (%p306) target = $region52
      $region51: #{tpu_custom_call.1} parent=5 // pred_region
        %s310 = ssub.s32 %s19, 1
        %s311 = smul.u32 2, %s29
        %p312 = scmp.lt.s32.totalorder %s28, 1
        %s313 = scalar_select %p312, %s28, 1
        %p314 = scmp.lt.s32.totalorder %s311, 1
        %s315 = scalar_select %p314, %s311, 1
        %s316 = smul.addr %s313, 2
        %s317 = sadd.s32 %s315, %s316
        %s318 = smul.addr %s317, 4
        %s319 = scalar_lea.vmem %s0, %s318
        %p320 = pneg %p59
        %p321 = pneg %p56
        %s322 = smul.u32 2, %s29
        %p323 = scmp.lt.s32.totalorder %s28, 1
        %s324 = scalar_select %p323, %s28, 1
        %p325 = scmp.lt.s32.totalorder %s322, 1
        %s326 = scalar_select %p325, %s322, 1
        %s327 = smul.addr %s324, 2
        %s328 = sadd.s32 %s326, %s327
        %s329 = smul.addr %s328, 4
        %s330 = scalar_lea.vmem %s1, %s329
        %p331 = pneg %p87
        %p332 = pneg %p84
        %p333 = pneg %p108
        %p334 = pneg %p105
        %p335 = pneg %p129
        %p336 = pneg %p126
        %p337 = pneg %p150
        %p338 = pneg %p147
        %p339 = pneg %p171
        %p340 = pneg %p168
        %p341 = pneg %p192
        %p342 = pneg %p189
        %p343 = pneg %p213
        %p344 = pneg %p210
        %p345 = pneg %p241
        %p346 = pneg %p238
        %s347 = sand.u32 %s228, 1
        %s348 = scalar_lea.sflag [#allocation4], %s347
        %s349 = sand.u32 %s228, 1
        %s350 = smul.addr %s349, 8
        %s351 = scalar_lea.vmem [#allocation3], %s350
        %s352 = smul.u32 2, %s29
        %p353 = scmp.lt.s32.totalorder %s28, 1
        %s354 = scalar_select %p353, %s28, 1
        %p355 = scmp.lt.s32.totalorder %s352, 1
        %s356 = scalar_select %p355, %s352, 1
        %s357 = smul.addr %s354, 2
        %s358 = sadd.s32 %s356, %s357
        %s359 = smul.addr %s358, 4
        %s360 = scalar_lea.vmem %s0, %s359
        %s361 = smul.u32 2, %s29
        %s362 = smul.u32 2, %s29
        %p363 = scmp.lt.s32.totalorder %s28, 1
        %s364 = scalar_select %p363, %s28, 1
        %p365 = scmp.lt.s32.totalorder %s362, 1
        %s366 = scalar_select %p365, %s362, 1
        %s367 = smul.addr %s364, 2
        %s368 = sadd.s32 %s366, %s367
        %s369 = smul.addr %s368, 4
        %s370 = scalar_lea.vmem %s1, %s369
        %s371 = smul.u32 2, %s29
        %s372 = smul.u32 2, %s29
        %v373 = vld [vmem:[%s360] sm:$0xff]
        %v374 = vld [vmem:[%s370] sm:$0xff]
        %v375 = vld [vmem:[%s2] sm:$0xff]
        %v376 = vld [vmem:[%s3] sm:$0xff]
        %378 = vset.pattern.permute.xlu0 0
        %379 = vperm.xlu0 %378, %v376
        %v380 = vpop.permute.xlu0 %379
        %v383 = vcombine.high %v373, %v373
        %vm384 = vcmask 31744
        %v386 = vsel %vm384, %v375, 0
        %vm388 = vcmask 1043456
        %v389 = vsel %vm388, %v373, 0
        %v391 = vsel %vm388, %v383, 0
        %393 = vmatprep.subr.mxu0 %v391
        %394 = vmatpush1.msra.mxu0 %v389
        %395 = vmatprep.subr.mxu0 0.0
        %396 = vmatpush1.msra.mxu0 0.0
        %397 = vmatprep.subr.mxu0 0.0
        %398 = vmatpush1.msra.mxu0 0.0
        %399 = vmatprep.subr.mxu0 0.0
        %400 = vmatpush1.msra.mxu0 0.0
        %401 = vmatprep.subr.mxu0 0.0
        %402 = vmatpush1.msra.mxu0 0.0
        %403 = vmatprep.subr.mxu0 0.0
        %404 = vmatpush1.msra.mxu0 0.0
        %405 = vmatprep.subr.mxu0 0.0
        %406 = vmatpush1.msra.mxu0 0.0
        %407 = vmatprep.subr.mxu0 0.0
        %408 = vmatpush1.msra.mxu0 0.0
        %409 = vmatprep.subr.mxu0 0.0
        %410 = vmatpush1.msra.mxu0 0.0
        %411 = vmatprep.subr.mxu0 0.0
        %412 = vmatpush1.msra.mxu0 0.0
        %413 = vmatprep.subr.mxu0 0.0
        %414 = vmatpush1.msra.mxu0 0.0
        %415 = vmatprep.subr.mxu0 0.0
        %416 = vmatpush1.msra.mxu0 0.0
        %417 = vmatprep.subr.mxu0 0.0
        %418 = vmatpush1.msra.mxu0 0.0
        %419 = vmatprep.subr.mxu0 0.0
        %420 = vmatpush1.msra.mxu0 0.0
        %421 = vmatprep.subr.mxu0 0.0
        %422 = vmatpush1.msra.mxu0 0.0
        %423 = vmatprep.subr.mxu0 0.0
        %424 = vmatpush1.msra.mxu0 0.0
        %425 = vmatprep.subr.mxu0 0.0
        %426 = vmatpush1.msra.mxu0 0.0
        %427 = vmatprep.subr.mxu0 0.0
        %428 = vmatpush1.msra.mxu0 0.0
        %429 = vmatprep.subr.mxu0 0.0
        %430 = vmatpush1.msra.mxu0 0.0
        %431 = vmatprep.subr.mxu0 0.0
        %432 = vmatpush1.msra.mxu0 0.0
        %433 = vmatprep.subr.mxu0 0.0
        %434 = vmatpush1.msra.mxu0 0.0
        %435 = vmatprep.subr.mxu0 0.0
        %436 = vmatpush1.msra.mxu0 0.0
        %437 = vmatprep.subr.mxu0 0.0
        %438 = vmatpush1.msra.mxu0 0.0
        %439 = vmatprep.subr.mxu0 0.0
        %440 = vmatpush1.msra.mxu0 0.0
        %441 = vmatprep.subr.mxu0 0.0
        %442 = vmatpush1.msra.mxu0 0.0
        %443 = vmatprep.subr.mxu0 0.0
        %444 = vmatpush1.msra.mxu0 0.0
        %445 = vmatprep.subr.mxu0 0.0
        %446 = vmatpush1.msra.mxu0 0.0
        %447 = vmatprep.subr.mxu0 0.0
        %448 = vmatpush1.msra.mxu0 0.0
        %449 = vmatprep.subr.mxu0 0.0
        %450 = vmatpush1.msra.mxu0 0.0
        %451 = vmatprep.subr.mxu0 0.0
        %452 = vmatpush1.msra.mxu0 0.0
        %453 = vmatprep.subr.mxu0 0.0
        %454 = vmatpush1.msra.mxu0 0.0
        %455 = vmatprep.subr.mxu0 0.0
        %456 = vmatpush1.msra.mxu0 0.0
        %457 = vmatprep.mubr.f32.mxu0 0.0
        %458 = vmatmul.mubr.f32.gmra.mrb[0].mxu0 %v386
        %v459 = vpop.f32.mrb[0].mxu0
        %v460 = vadd.f32 %v380, %v459
        %v461 = vpop.f32.mrb[0].mxu0
        %v462 = vadd.f32 %v380, %v461
        %463 = vdwg.mxu0
        %v464 = vld [vmem:[%s4] sm:$0xff]
        %v465 = vld [vmem:[%s5] sm:$0xff]
        %467 = vset.pattern.permute.xlu0 0
        %468 = vperm.xlu0 %467, %v465
        %v469 = vpop.permute.xlu0 %468
        %v472 = vcombine.high %v374, %v374
        %v474 = vsel %vm384, %v464, 0
        %v476 = vsel %vm388, %v374, 0
        %v478 = vsel %vm388, %v472, 0
        %480 = vmatprep.subr.mxu0 %v478
        %481 = vmatpush1.msra.mxu0 %v476
        %482 = vmatprep.subr.mxu0 0.0
        %483 = vmatpush1.msra.mxu0 0.0
        %484 = vmatprep.subr.mxu0 0.0
        %485 = vmatpush1.msra.mxu0 0.0
        %486 = vmatprep.subr.mxu0 0.0
        %487 = vmatpush1.msra.mxu0 0.0
        %488 = vmatprep.subr.mxu0 0.0
        %489 = vmatpush1.msra.mxu0 0.0
        %490 = vmatprep.subr.mxu0 0.0
        %491 = vmatpush1.msra.mxu0 0.0
        %492 = vmatprep.subr.mxu0 0.0
        %493 = vmatpush1.msra.mxu0 0.0
        %494 = vmatprep.subr.mxu0 0.0
        %495 = vmatpush1.msra.mxu0 0.0
        %496 = vmatprep.subr.mxu0 0.0
        %497 = vmatpush1.msra.mxu0 0.0
        %498 = vmatprep.subr.mxu0 0.0
        %499 = vmatpush1.msra.mxu0 0.0
        %500 = vmatprep.subr.mxu0 0.0
        %501 = vmatpush1.msra.mxu0 0.0
        %502 = vmatprep.subr.mxu0 0.0
        %503 = vmatpush1.msra.mxu0 0.0
        %504 = vmatprep.subr.mxu0 0.0
        %505 = vmatpush1.msra.mxu0 0.0
        %506 = vmatprep.subr.mxu0 0.0
        %507 = vmatpush1.msra.mxu0 0.0
        %508 = vmatprep.subr.mxu0 0.0
        %509 = vmatpush1.msra.mxu0 0.0
        %510 = vmatprep.subr.mxu0 0.0
        %511 = vmatpush1.msra.mxu0 0.0
        %512 = vmatprep.subr.mxu0 0.0
        %513 = vmatpush1.msra.mxu0 0.0
        %514 = vmatprep.subr.mxu0 0.0
        %515 = vmatpush1.msra.mxu0 0.0
        %516 = vmatprep.subr.mxu0 0.0
        %517 = vmatpush1.msra.mxu0 0.0
        %518 = vmatprep.subr.mxu0 0.0
        %519 = vmatpush1.msra.mxu0 0.0
        %520 = vmatprep.subr.mxu0 0.0
        %521 = vmatpush1.msra.mxu0 0.0
        %522 = vmatprep.subr.mxu0 0.0
        %523 = vmatpush1.msra.mxu0 0.0
        %524 = vmatprep.subr.mxu0 0.0
        %525 = vmatpush1.msra.mxu0 0.0
        %526 = vmatprep.subr.mxu0 0.0
        %527 = vmatpush1.msra.mxu0 0.0
        %528 = vmatprep.subr.mxu0 0.0
        %529 = vmatpush1.msra.mxu0 0.0
        %530 = vmatprep.subr.mxu0 0.0
        %531 = vmatpush1.msra.mxu0 0.0
        %532 = vmatprep.subr.mxu0 0.0
        %533 = vmatpush1.msra.mxu0 0.0
        %534 = vmatprep.subr.mxu0 0.0
        %535 = vmatpush1.msra.mxu0 0.0
        %536 = vmatprep.subr.mxu0 0.0
        %537 = vmatpush1.msra.mxu0 0.0
        %538 = vmatprep.subr.mxu0 0.0
        %539 = vmatpush1.msra.mxu0 0.0
        %540 = vmatprep.subr.mxu0 0.0
        %541 = vmatpush1.msra.mxu0 0.0
        %542 = vmatprep.subr.mxu0 0.0
        %543 = vmatpush1.msra.mxu0 0.0
        %544 = vmatprep.mubr.f32.mxu0 0.0
        %545 = vmatmul.mubr.f32.gmra.mrb[0].mxu0 %v474
        %v546 = vpop.f32.mrb[0].mxu0
        %v547 = vadd.f32 %v469, %v546
        %v548 = vpop.f32.mrb[0].mxu0
        %v549 = vadd.f32 %v469, %v548
        %550 = vdwg.mxu0
        %v551 = vadd.f32 %v460, %v547
        %v552 = vadd.f32 %v462, %v549
        %v553 = vmax.f32 %v551, 0.0
        %v554 = vmax.f32 %v552, 0.0
        %v555 = vld [vmem:[%s6] sm:$0x1]
        %v556 = vld [vmem:[#allocation2] sm:$0x1]
        %558 = vset.pattern.permute.xlu0 0
        %559 = vperm.xlu0 %558, %v556
        %v560 = vpop.permute.xlu0 %559
        %v562 = vlaneseq
        %v563 = vshrl.u32 %v562, 7
        %v564 = vsub.s32 0, %v563
        %v565 = vrot.slane %v560, %v564
        %vm566 = vcmask 64512
        %v568 = vsel %vm566, %v555, 0
        %570 = vmatprep.subr.mxu0 %v554
        %571 = vmatpush1.msra.mxu0 %v553
        %572 = vmatprep.subr.mxu0 0.0
        %573 = vmatpush1.msra.mxu0 0.0
        %574 = vmatprep.subr.mxu0 0.0
        %575 = vmatpush1.msra.mxu0 0.0
        %576 = vmatprep.subr.mxu0 0.0
        %577 = vmatpush1.msra.mxu0 0.0
        %578 = vmatprep.subr.mxu0 0.0
        %579 = vmatpush1.msra.mxu0 0.0
        %580 = vmatprep.subr.mxu0 0.0
        %581 = vmatpush1.msra.mxu0 0.0
        %582 = vmatprep.subr.mxu0 0.0
        %583 = vmatpush1.msra.mxu0 0.0
        %584 = vmatprep.subr.mxu0 0.0
        %585 = vmatpush1.msra.mxu0 0.0
        %586 = vmatprep.subr.mxu0 0.0
        %587 = vmatpush1.msra.mxu0 0.0
        %588 = vmatprep.subr.mxu0 0.0
        %589 = vmatpush1.msra.mxu0 0.0
        %590 = vmatprep.subr.mxu0 0.0
        %591 = vmatpush1.msra.mxu0 0.0
        %592 = vmatprep.subr.mxu0 0.0
        %593 = vmatpush1.msra.mxu0 0.0
        %594 = vmatprep.subr.mxu0 0.0
        %595 = vmatpush1.msra.mxu0 0.0
        %596 = vmatprep.subr.mxu0 0.0
        %597 = vmatpush1.msra.mxu0 0.0
        %598 = vmatprep.subr.mxu0 0.0
        %599 = vmatpush1.msra.mxu0 0.0
        %600 = vmatprep.subr.mxu0 0.0
        %601 = vmatpush1.msra.mxu0 0.0
        %602 = vmatprep.subr.mxu0 0.0
        %603 = vmatpush1.msra.mxu0 0.0
        %604 = vmatprep.subr.mxu0 0.0
        %605 = vmatpush1.msra.mxu0 0.0
        %606 = vmatprep.subr.mxu0 0.0
        %607 = vmatpush1.msra.mxu0 0.0
        %608 = vmatprep.subr.mxu0 0.0
        %609 = vmatpush1.msra.mxu0 0.0
        %610 = vmatprep.subr.mxu0 0.0
        %611 = vmatpush1.msra.mxu0 0.0
        %612 = vmatprep.subr.mxu0 0.0
        %613 = vmatpush1.msra.mxu0 0.0
        %614 = vmatprep.subr.mxu0 0.0
        %615 = vmatpush1.msra.mxu0 0.0
        %616 = vmatprep.subr.mxu0 0.0
        %617 = vmatpush1.msra.mxu0 0.0
        %618 = vmatprep.subr.mxu0 0.0
        %619 = vmatpush1.msra.mxu0 0.0
        %620 = vmatprep.subr.mxu0 0.0
        %621 = vmatpush1.msra.mxu0 0.0
        %622 = vmatprep.subr.mxu0 0.0
        %623 = vmatpush1.msra.mxu0 0.0
        %624 = vmatprep.subr.mxu0 0.0
        %625 = vmatpush1.msra.mxu0 0.0
        %626 = vmatprep.subr.mxu0 0.0
        %627 = vmatpush1.msra.mxu0 0.0
        %628 = vmatprep.subr.mxu0 0.0
        %629 = vmatpush1.msra.mxu0 0.0
        %630 = vmatprep.subr.mxu0 0.0
        %631 = vmatpush1.msra.mxu0 0.0
        %632 = vmatprep.subr.mxu0 0.0
        %633 = vmatpush1.msra.mxu0 0.0
        %634 = vmatprep.mubr.f32.mxu0 0.0
        %635 = vmatmul.mubr.f32.gmra.mrb[0].mxu0 %v568
        %v636 = vpop.f32.mrb[0].mxu0
        %v637 = vadd.f32 %v565, %v636
        %v638 = vpop.f32.mrb[0].mxu0
        %v639 = vadd.f32 %v565, %v638
        %640 = vdwg.mxu0
        %v641 = vxor.u32 %v637, 2147483648
        %v642 = vxor.u32 %v639, 2147483648
        %v643 = vmul.f32 %v641, 1.442695
        %v644 = vpow.pop %v643
        %v645 = vmul.f32 %v642, 1.442695
        %v646 = vpow.pop %v645
        %v647 = vadd.f32 %v644, 1.0
        %v648 = vadd.f32 %v646, 1.0
        %v649 = vrcp.pop %v647
        %v650 = vmul.f32 1.0, %v649
        %v651 = vrcp.pop %v648
        %v652 = vmul.f32 1.0, %v651
        %v653 = vlaneseq
        %v654 = vshrl.u32 %v653, 7
        %v655 = vsub.s32 0, %v654
        %v656 = vrot.slane %v650, %v655
        %v657 = vlaneseq
        %v658 = vshrl.u32 %v657, 7
        %v659 = vsub.s32 0, %v658
        %v660 = vrot.slane %v652, %v659
        %v663 = vcombine.low %v656, %v660
        %v665 = vmul.f32 %v374, %v663
        %666 = vst [vmem:[%s351] sm:$0xff] %v665
        %s667 = sand.u32 %s228, 1
        %s668 = scalar_lea.sflag [#allocation4], %s667
        %s669 = sand.u32 %s228, 1
        %s670 = smul.addr %s669, 8
        %s671 = scalar_lea.vmem [#allocation3], %s670
        // Predicated region
        $region53: #{tpu_custom_call.1} parent=51 // pred_check
          %p672 = pneg %p238
        $region54: #{tpu_custom_call.1} parent=51 // pred_check_branch
          %674 = sbr.rel (%p672) target = $region56
        $region55: #{tpu_custom_call.1} parent=51 // pred_region
          %s675 = smul.u32 2, %s29
          %s677 = ssub.s32 128, 128
          %678 = vsyncadd %s668, %s677
          %s679 = smul.addr %s28, 2
          %s680 = sadd.s32 %s675, %s679
          %s681 = smul.addr %s680, 64
          %s682 = scalar_lea.hbm %s8, %s681
          %s684 = sshll.u32 %s671, 4
          %s685 = int_to_ptr.vmem [resolvable:$true] %s684
          %687 = dma.vmem_to_hbm [thread:$0]  %s685, 128, %s682, %s668
        $region56: #{tpu_custom_call.1} parent=51 // pred_fallthru
          _
      $region52: #{tpu_custom_call.1} parent=5 // pred_fallthru
        _
      %p688 = scmp.le.s32.totalorder 2, %s19
      // Predicated region
      $region57: #{tpu_custom_call.1} parent=5 // pred_check
        %p689 = pneg %p688
      $region58: #{tpu_custom_call.1} parent=5 // pred_check_branch
        %691 = sbr.rel (%p689) target = $region60
      $region59: #{tpu_custom_call.1} parent=5 // pred_region
        %s692 = ssub.s32 %s19, 2
        // Predicated region
        $region61: #{tpu_custom_call.1} parent=59 // pred_check
          %p693 = pneg %p244
        $region62: #{tpu_custom_call.1} parent=59 // pred_check_branch
          %695 = sbr.rel (%p693) target = $region64
        $region63: #{tpu_custom_call.1} parent=59 // pred_region
          %s696 = sand.u32 %s229, 1
          %s697 = scalar_lea.sflag [#allocation4], %s696
          %s698 = sand.u32 %s229, 1
          %s699 = smul.addr %s698, 8
          %s700 = scalar_lea.vmem [#allocation3], %s699
          %701 = dma.done %s697, 128
        $region64: #{tpu_custom_call.1} parent=59 // pred_fallthru
          _
      $region60: #{tpu_custom_call.1} parent=5 // pred_fallthru
        _
    $region6: #{tpu_custom_call.1} parent=1 // loop_footer
      %s23 = sadd.s32 1, %s19
    $region7: #{tpu_custom_call.1} parent=1 // loop_footer_branch
      %18 = sbr.rel target = $region3
    $region8: #{tpu_custom_call.1} parent=1 // loop_exit
      _
    %702 = vsyncpa [#allocation4], 1
    %s703 = scalar_lea.sflag [#allocation4], 1
    %704 = vsyncpa %s703, 1

</llo_original>
